<compile_context>
chip_gen: v7x
topology: tpu7x:2x2x1
jax: 0.10.0
libtpu: 0.0.40
codegen_flags: <defaults>
</compile_context>

<pallas_src>
import jax
import jax.numpy as jnp
from jax.experimental import pallas as pl
from jax.experimental.pallas import tpu as pltpu

# Problem sizes (KarateClub-like): 34 nodes, 34 features (identity X),
# hidden dims 4 -> 4 -> 2, 4 classes.
N_NODES = 34
N_FEAT = 34
H1, H2, H3 = 4, 4, 2
N_CLASSES = 4

# Padded, TPU-friendly sizes.
NP = 64    # padded node count (multiple of 8 sublanes)
DP = 128   # padded feature/hidden/class dim (one 128-lane tile)

# Lane layout of the single fused output tile.
EMB_LO, EMB_HI = 0, H3                    # embedding h -> lanes [0, H3)
CLS_LO, CLS_HI = H3, H3 + N_CLASSES       # logits      -> lanes [H3, H3+C)


def gcn_kernel(a_ref, xw_ref, w_ref, b_ref, out_ref):
    """Fused GCN forward on padded, VMEM-resident tiles.

    a_ref  : (NP, NP)     normalized adjacency A_hat
    xw_ref : (NP, DP)     pre-multiplied X @ W1 (conv1 input transform)
    w_ref  : (3, DP, DP)  packed [W2, W3, Wc_shifted]
    b_ref  : (8, DP)      packed [b1, b2, b3, bc_shifted, 0...]
    out_ref: (NP, DP)     lanes [0,H3) = embedding, lanes [H3,H3+C) = logits
    """
    a = a_ref[...]
    b = b_ref[...]

    # conv1 + tanh  (X @ W1 already done in the wrapper)
    h = jnp.tanh(jnp.dot(a, xw_ref[...], preferred_element_type=jnp.float32)
                 + b[0:1, :])
    # conv2 + tanh
    hw = jnp.dot(h, w_ref[0], preferred_element_type=jnp.float32)
    h = jnp.tanh(jnp.dot(a, hw, preferred_element_type=jnp.float32) + b[1:2, :])
    # conv3 + tanh
    hw = jnp.dot(h, w_ref[1], preferred_element_type=jnp.float32)
    h = jnp.tanh(jnp.dot(a, hw, preferred_element_type=jnp.float32) + b[2:3, :])

    # Classifier: Wc/bc are packed into output lanes [H3, H3+C), so the logits
    # land there and lanes [0, H3) of the product are exactly zero.  h itself is
    # exactly zero outside lanes [0, H3) (zero-padded weights/biases, tanh(0)=0),
    # so a single VPU add merges embedding + logits into one lane-dense tile.
    logits = jnp.dot(h, w_ref[2], preferred_element_type=jnp.float32) + b[3:4, :]
    out_ref[...] = h + logits


def _pad2(x, rows, cols):
    x = jnp.asarray(x, jnp.float32)
    return jnp.zeros((rows, cols), jnp.float32).at[: x.shape[0], : x.shape[1]].set(x)


_VMEM = pl.BlockSpec(memory_space=pltpu.MemorySpace.VMEM)

_COST = pl.CostEstimate(
    flops=3 * 2 * NP * NP * DP + 3 * 2 * NP * DP * DP,   # 3x (A@HW) + 3x (H@W)
    transcendentals=3 * NP * DP,                         # 3x tanh
    bytes_accessed=4 * (NP * NP + 2 * NP * DP + 3 * DP * DP + 8 * DP),
)


@jax.jit
def gcn_forward(a_pad, x, w1, w_pack, b_pack):
    """a_pad: (NP,NP) pre-padded A_hat; x: (N,F); w1: (F,H1); packed params from pack_params."""
    # conv1's input transform; for KarateClub x is the identity so this is just W1.
    xw_pad = _pad2(jnp.dot(x, w1), NP, DP)

    fused = pl.pallas_call(
        gcn_kernel,
        out_shape=jax.ShapeDtypeStruct((NP, DP), jnp.float32),
        in_specs=[_VMEM, _VMEM, _VMEM, _VMEM],
        out_specs=_VMEM,
        cost_estimate=_COST,
    )(a_pad, xw_pad, w_pack, b_pack)

    h = fused[:N_NODES, EMB_LO:EMB_HI]          # final embedding (N, H3)
    out = fused[:N_NODES, CLS_LO:CLS_HI]        # classifier logits (N, C)
    return out, h


def pack_params(params):
    """One-time padding/packing of all parameters into 2 kernel inputs."""
    w2 = _pad2(params["w2"], DP, DP)
    w3 = _pad2(params["w3"], DP, DP)
    # Classifier weight shifted into output lanes [H3, H3+C) so that logits and
    # the embedding share one output tile (see gcn_kernel).
    wc = jnp.zeros((DP, DP), jnp.float32).at[:H3, CLS_LO:CLS_HI].set(
        jnp.asarray(params["wc"], jnp.float32))
    w_pack = jnp.stack([w2, w3, wc], axis=0)                      # (3, DP, DP)

    b_pack = jnp.zeros((8, DP), jnp.float32)
    b_pack = b_pack.at[0, :H1].set(jnp.asarray(params["b1"], jnp.float32))
    b_pack = b_pack.at[1, :H2].set(jnp.asarray(params["b2"], jnp.float32))
    b_pack = b_pack.at[2, :H3].set(jnp.asarray(params["b3"], jnp.float32))
    b_pack = b_pack.at[3, CLS_LO:CLS_HI].set(jnp.asarray(params["bc"], jnp.float32))

    return {"w1": jnp.asarray(params["w1"], jnp.float32),
            "w_pack": w_pack,
            "b_pack": b_pack}


def build_normalized_adjacency(edge_index, num_nodes):
    """Dense A_hat = D^-1/2 (A + I) D^-1/2 with a binary A (duplicate edges deduped)."""
    src, dst = edge_index
    a = jnp.zeros((num_nodes, num_nodes), jnp.float32).at[dst, src].set(1.0)
    a = jnp.maximum(a, jnp.eye(num_nodes, dtype=jnp.float32))     # self loops
    deg = a.sum(axis=1)
    dinv = jnp.where(deg > 0, 1.0 / jnp.sqrt(deg), 0.0)
    return dinv[:, None] * a * dinv[None, :]


def init_params(key):
    """Deterministic synthetic parameters (shapes from the module __init__)."""
    ks = jax.random.split(key, 4)

    def glorot(k, fan_in, fan_out):
        lim = jnp.sqrt(6.0 / (fan_in + fan_out))
        return jax.random.uniform(k, (fan_in, fan_out), jnp.float32, -lim, lim)

    return {
        "w1": glorot(ks[0], N_FEAT, H1), "b1": jnp.zeros((H1,), jnp.float32),
        "w2": glorot(ks[1], H1, H2),     "b2": jnp.zeros((H2,), jnp.float32),
        "w3": glorot(ks[2], H2, H3),     "b3": jnp.zeros((H3,), jnp.float32),
        "wc": glorot(ks[3], H3, N_CLASSES),
        "bc": jnp.zeros((N_CLASSES,), jnp.float32),
    }


def reference_forward(a_hat, x, p):
    h = jnp.tanh(a_hat @ (x @ p["w1"]) + p["b1"])
    h = jnp.tanh(a_hat @ (h @ p["w2"]) + p["b2"])
    h = jnp.tanh(a_hat @ (h @ p["w3"]) + p["b3"])
    return h @ p["wc"] + p["bc"], h


if __name__ == "__main__":
    key = jax.random.PRNGKey(0)
    k_graph, k_param = jax.random.split(key)

    # Synthetic deterministic undirected graph on 34 nodes (KarateClub-sized).
    n_rand_edges = 78
    src = jax.random.randint(jax.random.fold_in(k_graph, 0), (n_rand_edges,), 0, N_NODES)
    dst = jax.random.randint(jax.random.fold_in(k_graph, 1), (n_rand_edges,), 0, N_NODES)
    keep = src != dst
    src, dst = src[keep], dst[keep]
    edge_index = jnp.stack([jnp.concatenate([src, dst]),
                            jnp.concatenate([dst, src])], axis=0)  # symmetric

    # KarateClub node features are the identity matrix.
    x = jnp.eye(N_NODES, N_FEAT, dtype=jnp.float32)

    a_hat = build_normalized_adjacency(edge_index, N_NODES)
    params = init_params(k_param)

    # One-time prep (hoisted out of the per-call path): pad A_hat, pack params.
    a_pad = _pad2(a_hat, NP, NP)
    packed = pack_params(params)

    out, h = gcn_forward(a_pad, x, packed["w1"], packed["w_pack"], packed["b_pack"])
    jax.block_until_ready((out, h))

    out_ref, h_ref = reference_forward(a_hat, x, params)
    assert out.shape == (N_NODES, N_CLASSES) and h.shape == (N_NODES, H3)
    assert jnp.allclose(out, out_ref, atol=1e-5, rtol=1e-5)
    assert jnp.allclose(h, h_ref, atol=1e-5, rtol=1e-5)

    print("KERNEL_OK")
</pallas_src>

<mosaic_0001>
module attributes {stable_mosaic.version = 11 : i64} {
  func.func @gcn_kernel(%arg0: memref<64x64xf32, #tpu.memory_space<vmem>>, %arg1: memref<64x128xf32, #tpu.memory_space<vmem>>, %arg2: memref<3x128x128xf32, #tpu.memory_space<vmem>>, %arg3: memref<8x128xf32, #tpu.memory_space<vmem>>, %arg4: memref<64x128xf32, #tpu.memory_space<vmem>>) attributes {dimension_semantics = [], scalar_prefetch = 0 : i64, scratch_operands = 0 : i64, tpu.core_type = #tpu.core_type<tc>} {
    %c0 = arith.constant 0 : index
    %c0_0 = arith.constant 0 : index
    %0 = vector.load %arg0[%c0, %c0_0] : memref<64x64xf32, #tpu.memory_space<vmem>>, vector<64x64xf32>
    %c0_1 = arith.constant 0 : index
    %c0_2 = arith.constant 0 : index
    %1 = vector.load %arg3[%c0_1, %c0_2] : memref<8x128xf32, #tpu.memory_space<vmem>>, vector<8x128xf32>
    %c0_3 = arith.constant 0 : index
    %c0_4 = arith.constant 0 : index
    %2 = vector.load %arg1[%c0_3, %c0_4] : memref<64x128xf32, #tpu.memory_space<vmem>>, vector<64x128xf32>
    %cst = arith.constant dense<0.000000e+00> : vector<64x128xf32>
    %3 = tpu.matmul %0, %2, %cst {dimension_numbers = #tpu.dot_dimension_numbers<[1], [0], [0], [1], [0, 0, 1, 1], [], []>} : vector<64x64xf32>, vector<64x128xf32>, vector<64x128xf32> -> vector<64x128xf32>
    %4 = vector.extract_strided_slice %1 {offsets = [0, 0], sizes = [1, 128], strides = [1, 1]} : vector<8x128xf32> to vector<1x128xf32>
    %5 = vector.broadcast %4 : vector<1x128xf32> to vector<64x128xf32>
    %6 = arith.addf %3, %5 : vector<64x128xf32>
    %7 = math.tanh %6 : vector<64x128xf32>
    %c0_5 = arith.constant 0 : index
    %c0_6 = arith.constant 0 : index
    %c0_7 = arith.constant 0 : index
    %8 = vector.load %arg2[%c0_5, %c0_6, %c0_7] : memref<3x128x128xf32, #tpu.memory_space<vmem>>, vector<1x128x128xf32>
    %9 = vector.shape_cast %8 : vector<1x128x128xf32> to vector<128x128xf32>
    %cst_8 = arith.constant dense<0.000000e+00> : vector<64x128xf32>
    %10 = tpu.matmul %7, %9, %cst_8 {dimension_numbers = #tpu.dot_dimension_numbers<[1], [0], [0], [1], [0, 0, 1, 1], [], []>} : vector<64x128xf32>, vector<128x128xf32>, vector<64x128xf32> -> vector<64x128xf32>
    %cst_9 = arith.constant dense<0.000000e+00> : vector<64x128xf32>
    %11 = tpu.matmul %0, %10, %cst_9 {dimension_numbers = #tpu.dot_dimension_numbers<[1], [0], [0], [1], [0, 0, 1, 1], [], []>} : vector<64x64xf32>, vector<64x128xf32>, vector<64x128xf32> -> vector<64x128xf32>
    %12 = vector.extract_strided_slice %1 {offsets = [1, 0], sizes = [1, 128], strides = [1, 1]} : vector<8x128xf32> to vector<1x128xf32>
    %13 = vector.broadcast %12 : vector<1x128xf32> to vector<64x128xf32>
    %14 = arith.addf %11, %13 : vector<64x128xf32>
    %15 = math.tanh %14 : vector<64x128xf32>
    %c1 = arith.constant 1 : index
    %c0_10 = arith.constant 0 : index
    %c0_11 = arith.constant 0 : index
    %16 = vector.load %arg2[%c1, %c0_10, %c0_11] : memref<3x128x128xf32, #tpu.memory_space<vmem>>, vector<1x128x128xf32>
    %17 = vector.shape_cast %16 : vector<1x128x128xf32> to vector<128x128xf32>
    %cst_12 = arith.constant dense<0.000000e+00> : vector<64x128xf32>
    %18 = tpu.matmul %15, %17, %cst_12 {dimension_numbers = #tpu.dot_dimension_numbers<[1], [0], [0], [1], [0, 0, 1, 1], [], []>} : vector<64x128xf32>, vector<128x128xf32>, vector<64x128xf32> -> vector<64x128xf32>
    %cst_13 = arith.constant dense<0.000000e+00> : vector<64x128xf32>
    %19 = tpu.matmul %0, %18, %cst_13 {dimension_numbers = #tpu.dot_dimension_numbers<[1], [0], [0], [1], [0, 0, 1, 1], [], []>} : vector<64x64xf32>, vector<64x128xf32>, vector<64x128xf32> -> vector<64x128xf32>
    %20 = vector.extract_strided_slice %1 {offsets = [2, 0], sizes = [1, 128], strides = [1, 1]} : vector<8x128xf32> to vector<1x128xf32>
    %21 = vector.broadcast %20 : vector<1x128xf32> to vector<64x128xf32>
    %22 = arith.addf %19, %21 : vector<64x128xf32>
    %23 = math.tanh %22 : vector<64x128xf32>
    %c2 = arith.constant 2 : index
    %c0_14 = arith.constant 0 : index
    %c0_15 = arith.constant 0 : index
    %24 = vector.load %arg2[%c2, %c0_14, %c0_15] : memref<3x128x128xf32, #tpu.memory_space<vmem>>, vector<1x128x128xf32>
    %25 = vector.shape_cast %24 : vector<1x128x128xf32> to vector<128x128xf32>
    %cst_16 = arith.constant dense<0.000000e+00> : vector<64x128xf32>
    %26 = tpu.matmul %23, %25, %cst_16 {dimension_numbers = #tpu.dot_dimension_numbers<[1], [0], [0], [1], [0, 0, 1, 1], [], []>} : vector<64x128xf32>, vector<128x128xf32>, vector<64x128xf32> -> vector<64x128xf32>
    %27 = vector.extract_strided_slice %1 {offsets = [3, 0], sizes = [1, 128], strides = [1, 1]} : vector<8x128xf32> to vector<1x128xf32>
    %28 = vector.broadcast %27 : vector<1x128xf32> to vector<64x128xf32>
    %29 = arith.addf %26, %28 : vector<64x128xf32>
    %30 = arith.addf %23, %29 : vector<64x128xf32>
    %c0_17 = arith.constant 0 : index
    %c0_18 = arith.constant 0 : index
    %31 = vector.load %arg4[%c0_17, %c0_18] : memref<64x128xf32, #tpu.memory_space<vmem>>, vector<64x128xf32>
    tpu.vector_store %arg4[%c0_17, %c0_18], %30 {strides = array<i32>} : memref<64x128xf32, #tpu.memory_space<vmem>>, vector<64x128xf32>,
    return
  }
}

</mosaic_0001>

<llo_original>
// kernel: gcn_forward.1
$region0: #{gcn_forward.1}
  #allocation0 [shape = 'u32[]', space=smem, size = 0x4, offset = 0x4, fixed_abs, tag = 'smem constant byte address 0x4 - core index']
  #allocation1 [shape = 'u32[144,128]{1,0:T(1,128)}', space=vmem, size = 0x12000, scoped, tag = 'internal scratch']
  %s0 = inlined_call_operand.vmem [shape: f32[64,64], index: 0, kind: input, shape index: {}]
  %s1 = inlined_call_operand.vmem [shape: f32[64,128], index: 1, kind: input, shape index: {}]
  %s2 = inlined_call_operand.hbm [shape: f32[3,128,128], index: 2, kind: input, shape index: {}]
  %s3 = inlined_call_operand.vmem [shape: f32[8,128], index: 3, kind: input, shape index: {}]
  %s4 = inlined_call_operand.vmem [shape: f32[64,128], index: 4, kind: output, shape index: {}]
  %s5 = sld [smem:[#allocation0]]
  $region30: #{gcn_forward.1} parent=0
    _
  %s7 = ssub.s32 1, %s5
  %s8 = scalar_select 0, %s7, %s5
  $region1: #{gcn_forward.1} parent=0
    #allocation2 [shape = 'u8[196608]{0}', space=vmem, size = 0x30000, scoped, tag = 'input window, operand 2, single buffered']
    #allocation3 [shape = 's32[1]{0}', space=sflag, size = 0x4, scoped, tag = 'scoped memory for gcn_forward.1']
    %9 = vsyncpa [#allocation3], 0
    // Predicated region
    $region2: #{gcn_forward.1} parent=1 // pred_check
      _
    $region3: #{gcn_forward.1} parent=1 // pred_check_branch
      %11 = sbr.rel (0) target = $region5
    $region4: #{gcn_forward.1} parent=1 // pred_region
      _
    $region5: #{gcn_forward.1} parent=1 // pred_fallthru
      _
    // Predicated region
    $region6: #{gcn_forward.1} parent=1 // pred_check
      _
    $region7: #{gcn_forward.1} parent=1 // pred_check_branch
      %13 = sbr.rel (0) target = $region9
    $region8: #{gcn_forward.1} parent=1 // pred_region
      _
    $region9: #{gcn_forward.1} parent=1 // pred_fallthru
      _
    // Predicated region
    $region10: #{gcn_forward.1} parent=1 // pred_check
      _
    $region11: #{gcn_forward.1} parent=1 // pred_check_branch
      %15 = sbr.rel (0) target = $region13
    $region12: #{gcn_forward.1} parent=1 // pred_region
      %s17 = ssub.s32 6144, 6144
      %18 = vsyncadd [#allocation3], %s17
      %s19 = sshll.u32 [#allocation2], 4
      %s20 = int_to_ptr.vmem [resolvable:$true] %s19
      %25 = dma.hbm_to_vmem [thread:$0]  %s2, 6144, %s20, [#allocation3], 128, 128, 8
    $region13: #{gcn_forward.1} parent=1 // pred_fallthru
      _
    // Predicated region
    $region14: #{gcn_forward.1} parent=1 // pred_check
      _
    $region15: #{gcn_forward.1} parent=1 // pred_check_branch
      %27 = sbr.rel (0) target = $region17
    $region16: #{gcn_forward.1} parent=1 // pred_region
      _
    $region17: #{gcn_forward.1} parent=1 // pred_fallthru
      _
    // Predicated region
    $region18: #{gcn_forward.1} parent=1 // pred_check
      _
    $region19: #{gcn_forward.1} parent=1 // pred_check_branch
      %29 = sbr.rel (0) target = $region21
    $region20: #{gcn_forward.1} parent=1 // pred_region
      %30 = dma.done [#allocation3], 6144
    $region21: #{gcn_forward.1} parent=1 // pred_fallthru
      _
    %v31 = vld [vmem:[%s0] sm:$0xff]
    %v32 = vld [vmem:[%s0 + $0x8] sm:$0xff]
    %v33 = vld [vmem:[%s0 + $0x10] sm:$0xff]
    %v34 = vld [vmem:[%s0 + $0x18] sm:$0xff]
    %v35 = vld [vmem:[%s0 + $0x20] sm:$0xff]
    %v36 = vld [vmem:[%s0 + $0x28] sm:$0xff]
    %v37 = vld [vmem:[%s0 + $0x30] sm:$0xff]
    %v38 = vld [vmem:[%s0 + $0x38] sm:$0xff]
    %v39 = vld [vmem:[%s3] sm:$0xff]
    %v40 = vld [vmem:[%s1] sm:$0xff]
    %v41 = vld [vmem:[%s1 + $0x8] sm:$0xff]
    %v42 = vld [vmem:[%s1 + $0x10] sm:$0xff]
    %v43 = vld [vmem:[%s1 + $0x18] sm:$0xff]
    %v44 = vld [vmem:[%s1 + $0x20] sm:$0xff]
    %v45 = vld [vmem:[%s1 + $0x28] sm:$0xff]
    %v46 = vld [vmem:[%s1 + $0x30] sm:$0xff]
    %v47 = vld [vmem:[%s1 + $0x38] sm:$0xff]
    %v48 = vlaneseq
    %v49 = vshrl.u32 %v48, 7
    %v50 = vsub.s32 0, %v49
    %v51 = vrot.slane %v39, %v50
    %vm52 = vcmask 523264
    %v54 = vsel %vm52, %v31, 0
    %v57 = vsel %vm52, %v32, 0
    %v60 = vsel %vm52, %v33, 0
    %v63 = vsel %vm52, %v34, 0
    %v66 = vsel %vm52, %v35, 0
    %v69 = vsel %vm52, %v36, 0
    %v72 = vsel %vm52, %v37, 0
    %v75 = vsel %vm52, %v38, 0
    %77 = vmatprep.subr.mxu0 0.0
    %78 = vmatpush1.msra.mxu0 %v40
    %79 = vmatprep.subr.mxu0 0.0
    %80 = vmatpush1.msra.mxu0 %v41
    %81 = vmatprep.subr.mxu0 0.0
    %82 = vmatpush1.msra.mxu0 %v42
    %83 = vmatprep.subr.mxu0 0.0
    %84 = vmatpush1.msra.mxu0 %v43
    %85 = vmatprep.subr.mxu0 0.0
    %86 = vmatpush1.msra.mxu0 %v44
    %87 = vmatprep.subr.mxu0 0.0
    %88 = vmatpush1.msra.mxu0 %v45
    %89 = vmatprep.subr.mxu0 0.0
    %90 = vmatpush1.msra.mxu0 %v46
    %91 = vmatprep.subr.mxu0 0.0
    %92 = vmatpush1.msra.mxu0 %v47
    %93 = vmatprep.subr.mxu0 0.0
    %94 = vmatpush1.msra.mxu0 0.0
    %95 = vmatprep.subr.mxu0 0.0
    %96 = vmatpush1.msra.mxu0 0.0
    %97 = vmatprep.subr.mxu0 0.0
    %98 = vmatpush1.msra.mxu0 0.0
    %99 = vmatprep.subr.mxu0 0.0
    %100 = vmatpush1.msra.mxu0 0.0
    %101 = vmatprep.subr.mxu0 0.0
    %102 = vmatpush1.msra.mxu0 0.0
    %103 = vmatprep.subr.mxu0 0.0
    %104 = vmatpush1.msra.mxu0 0.0
    %105 = vmatprep.subr.mxu0 0.0
    %106 = vmatpush1.msra.mxu0 0.0
    %107 = vmatprep.subr.mxu0 0.0
    %108 = vmatpush1.msra.mxu0 0.0
    %109 = vmatprep.subr.mxu0 0.0
    %110 = vmatpush1.msra.mxu0 0.0
    %111 = vmatprep.subr.mxu0 0.0
    %112 = vmatpush1.msra.mxu0 0.0
    %113 = vmatprep.subr.mxu0 0.0
    %114 = vmatpush1.msra.mxu0 0.0
    %115 = vmatprep.subr.mxu0 0.0
    %116 = vmatpush1.msra.mxu0 0.0
    %117 = vmatprep.subr.mxu0 0.0
    %118 = vmatpush1.msra.mxu0 0.0
    %119 = vmatprep.subr.mxu0 0.0
    %120 = vmatpush1.msra.mxu0 0.0
    %121 = vmatprep.subr.mxu0 0.0
    %122 = vmatpush1.msra.mxu0 0.0
    %123 = vmatprep.subr.mxu0 0.0
    %124 = vmatpush1.msra.mxu0 0.0
    %125 = vmatprep.subr.mxu0 0.0
    %126 = vmatpush1.msra.mxu0 0.0
    %127 = vmatprep.subr.mxu0 0.0
    %128 = vmatpush1.msra.mxu0 0.0
    %129 = vmatprep.subr.mxu0 0.0
    %130 = vmatpush1.msra.mxu0 0.0
    %131 = vmatprep.subr.mxu0 0.0
    %132 = vmatpush1.msra.mxu0 0.0
    %133 = vmatprep.subr.mxu0 0.0
    %134 = vmatpush1.msra.mxu0 0.0
    %135 = vmatprep.subr.mxu0 0.0
    %136 = vmatpush1.msra.mxu0 0.0
    %137 = vmatprep.subr.mxu0 0.0
    %138 = vmatpush1.msra.mxu0 0.0
    %139 = vmatprep.subr.mxu0 0.0
    %140 = vmatpush1.msra.mxu0 0.0
    %141 = vmatprep.mubr.f32.mxu0 0.0
    %142 = vmatmul.mubr.f32.gmra.mrb[0].mxu0 %v54
    %v143 = vpop.f32.mrb[0].mxu0
    %v144 = vadd.f32 %v51, %v143
    %v145 = vpop.f32.mrb[0].mxu0
    %146 = vmatprep.mubr.f32.mxu0 0.0
    %147 = vmatmul.mubr.f32.gmra.mrb[0].mxu0 %v57
    %v148 = vpop.f32.mrb[0].mxu0
    %v149 = vadd.f32 %v51, %v148
    %v150 = vpop.f32.mrb[0].mxu0
    %151 = vmatprep.mubr.f32.mxu0 0.0
    %152 = vmatmul.mubr.f32.gmra.mrb[0].mxu0 %v60
    %v153 = vpop.f32.mrb[0].mxu0
    %v154 = vadd.f32 %v51, %v153
    %v155 = vpop.f32.mrb[0].mxu0
    %156 = vmatprep.mubr.f32.mxu0 0.0
    %157 = vmatmul.mubr.f32.gmra.mrb[0].mxu0 %v63
    %v158 = vpop.f32.mrb[0].mxu0
    %v159 = vadd.f32 %v51, %v158
    %v160 = vpop.f32.mrb[0].mxu0
    %161 = vmatprep.mubr.f32.mxu0 0.0
    %162 = vmatmul.mubr.f32.gmra.mrb[0].mxu0 %v66
    %v163 = vpop.f32.mrb[0].mxu0
    %v164 = vadd.f32 %v51, %v163
    %v165 = vpop.f32.mrb[0].mxu0
    %166 = vmatprep.mubr.f32.mxu0 0.0
    %167 = vmatmul.mubr.f32.gmra.mrb[0].mxu0 %v69
    %v168 = vpop.f32.mrb[0].mxu0
    %v169 = vadd.f32 %v51, %v168
    %v170 = vpop.f32.mrb[0].mxu0
    %171 = vmatprep.mubr.f32.mxu0 0.0
    %172 = vmatmul.mubr.f32.gmra.mrb[0].mxu0 %v72
    %v173 = vpop.f32.mrb[0].mxu0
    %v174 = vadd.f32 %v51, %v173
    %v175 = vpop.f32.mrb[0].mxu0
    %176 = vmatprep.mubr.f32.mxu0 0.0
    %177 = vmatmul.mubr.f32.gmra.mrb[0].mxu0 %v75
    %v178 = vpop.f32.mrb[0].mxu0
    %v179 = vadd.f32 %v51, %v178
    %v180 = vpop.f32.mrb[0].mxu0
    %181 = vdwg.mxu0
    %v182 = vtanh.pop %v144
    %v183 = vtanh.pop %v149
    %v184 = vtanh.pop %v154
    %v185 = vtanh.pop %v159
    %v186 = vtanh.pop %v164
    %v187 = vtanh.pop %v169
    %v188 = vtanh.pop %v174
    %v189 = vtanh.pop %v179
    %v190 = vld [vmem:[#allocation2] sm:$0xff]
    %v191 = vld [vmem:[#allocation2 + $0x8] sm:$0xff]
    %v192 = vld [vmem:[#allocation2 + $0x10] sm:$0xff]
    %v193 = vld [vmem:[#allocation2 + $0x18] sm:$0xff]
    %v194 = vld [vmem:[#allocation2 + $0x20] sm:$0xff]
    %v195 = vld [vmem:[#allocation2 + $0x28] sm:$0xff]
    %v196 = vld [vmem:[#allocation2 + $0x30] sm:$0xff]
    %v197 = vld [vmem:[#allocation2 + $0x38] sm:$0xff]
    %v198 = vld [vmem:[#allocation2 + $0x40] sm:$0xff]
    %v199 = vld [vmem:[#allocation2 + $0x48] sm:$0xff]
    %v200 = vld [vmem:[#allocation2 + $0x50] sm:$0xff]
    %v201 = vld [vmem:[#allocation2 + $0x58] sm:$0xff]
    %v202 = vld [vmem:[#allocation2 + $0x60] sm:$0xff]
    %v203 = vld [vmem:[#allocation2 + $0x68] sm:$0xff]
    %v204 = vld [vmem:[#allocation2 + $0x70] sm:$0xff]
    %v205 = vld [vmem:[#allocation2 + $0x78] sm:$0xff]
    %206 = vmatprep.subr.mxu0 0.0
    %207 = vmatpush1.msra.mxu0 %v190
    %208 = vmatprep.subr.mxu0 0.0
    %209 = vmatpush1.msra.mxu0 %v191
    %210 = vmatprep.subr.mxu0 0.0
    %211 = vmatpush1.msra.mxu0 %v192
    %212 = vmatprep.subr.mxu0 0.0
    %213 = vmatpush1.msra.mxu0 %v193
    %214 = vmatprep.subr.mxu0 0.0
    %215 = vmatpush1.msra.mxu0 %v194
    %216 = vmatprep.subr.mxu0 0.0
    %217 = vmatpush1.msra.mxu0 %v195
    %218 = vmatprep.subr.mxu0 0.0
    %219 = vmatpush1.msra.mxu0 %v196
    %220 = vmatprep.subr.mxu0 0.0
    %221 = vmatpush1.msra.mxu0 %v197
    %222 = vmatprep.subr.mxu0 0.0
    %223 = vmatpush1.msra.mxu0 %v198
    %224 = vmatprep.subr.mxu0 0.0
    %225 = vmatpush1.msra.mxu0 %v199
    %226 = vmatprep.subr.mxu0 0.0
    %227 = vmatpush1.msra.mxu0 %v200
    %228 = vmatprep.subr.mxu0 0.0
    %229 = vmatpush1.msra.mxu0 %v201
    %230 = vmatprep.subr.mxu0 0.0
    %231 = vmatpush1.msra.mxu0 %v202
    %232 = vmatprep.subr.mxu0 0.0
    %233 = vmatpush1.msra.mxu0 %v203
    %234 = vmatprep.subr.mxu0 0.0
    %235 = vmatpush1.msra.mxu0 %v204
    %236 = vmatprep.subr.mxu0 0.0
    %237 = vmatpush1.msra.mxu0 %v205
    %238 = vmatprep.subr.mxu0 0.0
    %239 = vmatpush1.msra.mxu0 0.0
    %240 = vmatprep.subr.mxu0 0.0
    %241 = vmatpush1.msra.mxu0 0.0
    %242 = vmatprep.subr.mxu0 0.0
    %243 = vmatpush1.msra.mxu0 0.0
    %244 = vmatprep.subr.mxu0 0.0
    %245 = vmatpush1.msra.mxu0 0.0
    %246 = vmatprep.subr.mxu0 0.0
    %247 = vmatpush1.msra.mxu0 0.0
    %248 = vmatprep.subr.mxu0 0.0
    %249 = vmatpush1.msra.mxu0 0.0
    %250 = vmatprep.subr.mxu0 0.0
    %251 = vmatpush1.msra.mxu0 0.0
    %252 = vmatprep.subr.mxu0 0.0
    %253 = vmatpush1.msra.mxu0 0.0
    %254 = vmatprep.subr.mxu0 0.0
    %255 = vmatpush1.msra.mxu0 0.0
    %256 = vmatprep.subr.mxu0 0.0
    %257 = vmatpush1.msra.mxu0 0.0
    %258 = vmatprep.subr.mxu0 0.0
    %259 = vmatpush1.msra.mxu0 0.0
    %260 = vmatprep.subr.mxu0 0.0
    %261 = vmatpush1.msra.mxu0 0.0
    %262 = vmatprep.subr.mxu0 0.0
    %263 = vmatpush1.msra.mxu0 0.0
    %264 = vmatprep.subr.mxu0 0.0
    %265 = vmatpush1.msra.mxu0 0.0
    %266 = vmatprep.subr.mxu0 0.0
    %267 = vmatpush1.msra.mxu0 0.0
    %268 = vmatprep.subr.mxu0 0.0
    %269 = vmatpush1.msra.mxu0 0.0
    %270 = vmatprep.mubr.f32.mxu0 0.0
    %271 = vmatmul.mubr.f32.gmra.mrb[0].mxu0 %v182
    %v272 = vpop.f32.mrb[0].mxu0
    %v273 = vadd.f32 0.0, %v272
    %v274 = vpop.f32.mrb[0].mxu0
    %275 = vmatprep.mubr.f32.mxu0 0.0
    %276 = vmatmul.mubr.f32.gmra.mrb[0].mxu0 %v183
    %v277 = vpop.f32.mrb[0].mxu0
    %v278 = vadd.f32 0.0, %v277
    %v279 = vpop.f32.mrb[0].mxu0
    %280 = vmatprep.mubr.f32.mxu0 0.0
    %281 = vmatmul.mubr.f32.gmra.mrb[0].mxu0 %v184
    %v282 = vpop.f32.mrb[0].mxu0
    %v283 = vadd.f32 0.0, %v282
    %v284 = vpop.f32.mrb[0].mxu0
    %285 = vmatprep.mubr.f32.mxu0 0.0
    %286 = vmatmul.mubr.f32.gmra.mrb[0].mxu0 %v185
    %v287 = vpop.f32.mrb[0].mxu0
    %v288 = vadd.f32 0.0, %v287
    %v289 = vpop.f32.mrb[0].mxu0
    %290 = vmatprep.mubr.f32.mxu0 0.0
    %291 = vmatmul.mubr.f32.gmra.mrb[0].mxu0 %v186
    %v292 = vpop.f32.mrb[0].mxu0
    %v293 = vadd.f32 0.0, %v292
    %v294 = vpop.f32.mrb[0].mxu0
    %295 = vmatprep.mubr.f32.mxu0 0.0
    %296 = vmatmul.mubr.f32.gmra.mrb[0].mxu0 %v187
    %v297 = vpop.f32.mrb[0].mxu0
    %v298 = vadd.f32 0.0, %v297
    %v299 = vpop.f32.mrb[0].mxu0
    %300 = vmatprep.mubr.f32.mxu0 0.0
    %301 = vmatmul.mubr.f32.gmra.mrb[0].mxu0 %v188
    %v302 = vpop.f32.mrb[0].mxu0
    %v303 = vadd.f32 0.0, %v302
    %v304 = vpop.f32.mrb[0].mxu0
    %305 = vmatprep.mubr.f32.mxu0 0.0
    %306 = vmatmul.mubr.f32.gmra.mrb[0].mxu0 %v189
    %v307 = vpop.f32.mrb[0].mxu0
    %v308 = vadd.f32 0.0, %v307
    %v309 = vpop.f32.mrb[0].mxu0
    %310 = vdwg.mxu0
    %v311 = vlaneseq
    %v312 = vshrl.u32 %v311, 7
    %v313 = vsub.s32 1, %v312
    %v314 = vrot.slane %v39, %v313
    %315 = vmatprep.subr.mxu0 0.0
    %316 = vmatpush1.msra.mxu0 %v273
    %317 = vmatprep.subr.mxu0 0.0
    %318 = vmatpush1.msra.mxu0 %v278
    %319 = vmatprep.subr.mxu0 0.0
    %320 = vmatpush1.msra.mxu0 %v283
    %321 = vmatprep.subr.mxu0 0.0
    %322 = vmatpush1.msra.mxu0 %v288
    %323 = vmatprep.subr.mxu0 0.0
    %324 = vmatpush1.msra.mxu0 %v293
    %325 = vmatprep.subr.mxu0 0.0
    %326 = vmatpush1.msra.mxu0 %v298
    %327 = vmatprep.subr.mxu0 0.0
    %328 = vmatpush1.msra.mxu0 %v303
    %329 = vmatprep.subr.mxu0 0.0
    %330 = vmatpush1.msra.mxu0 %v308
    %331 = vmatprep.subr.mxu0 0.0
    %332 = vmatpush1.msra.mxu0 0.0
    %333 = vmatprep.subr.mxu0 0.0
    %334 = vmatpush1.msra.mxu0 0.0
    %335 = vmatprep.subr.mxu0 0.0
    %336 = vmatpush1.msra.mxu0 0.0
    %337 = vmatprep.subr.mxu0 0.0
    %338 = vmatpush1.msra.mxu0 0.0
    %339 = vmatprep.subr.mxu0 0.0
    %340 = vmatpush1.msra.mxu0 0.0
    %341 = vmatprep.subr.mxu0 0.0
    %342 = vmatpush1.msra.mxu0 0.0
    %343 = vmatprep.subr.mxu0 0.0
    %344 = vmatpush1.msra.mxu0 0.0
    %345 = vmatprep.subr.mxu0 0.0
    %346 = vmatpush1.msra.mxu0 0.0
    %347 = vmatprep.subr.mxu0 0.0
    %348 = vmatpush1.msra.mxu0 0.0
    %349 = vmatprep.subr.mxu0 0.0
    %350 = vmatpush1.msra.mxu0 0.0
    %351 = vmatprep.subr.mxu0 0.0
    %352 = vmatpush1.msra.mxu0 0.0
    %353 = vmatprep.subr.mxu0 0.0
    %354 = vmatpush1.msra.mxu0 0.0
    %355 = vmatprep.subr.mxu0 0.0
    %356 = vmatpush1.msra.mxu0 0.0
    %357 = vmatprep.subr.mxu0 0.0
    %358 = vmatpush1.msra.mxu0 0.0
    %359 = vmatprep.subr.mxu0 0.0
    %360 = vmatpush1.msra.mxu0 0.0
    %361 = vmatprep.subr.mxu0 0.0
    %362 = vmatpush1.msra.mxu0 0.0
    %363 = vmatprep.subr.mxu0 0.0
    %364 = vmatpush1.msra.mxu0 0.0
    %365 = vmatprep.subr.mxu0 0.0
    %366 = vmatpush1.msra.mxu0 0.0
    %367 = vmatprep.subr.mxu0 0.0
    %368 = vmatpush1.msra.mxu0 0.0
    %369 = vmatprep.subr.mxu0 0.0
    %370 = vmatpush1.msra.mxu0 0.0
    %371 = vmatprep.subr.mxu0 0.0
    %372 = vmatpush1.msra.mxu0 0.0
    %373 = vmatprep.subr.mxu0 0.0
    %374 = vmatpush1.msra.mxu0 0.0
    %375 = vmatprep.subr.mxu0 0.0
    %376 = vmatpush1.msra.mxu0 0.0
    %377 = vmatprep.subr.mxu0 0.0
    %378 = vmatpush1.msra.mxu0 0.0
    %379 = vmatprep.mubr.f32.mxu0 0.0
    %380 = vmatmul.mubr.f32.gmra.mrb[0].mxu0 %v54
    %v381 = vpop.f32.mrb[0].mxu0
    %v382 = vadd.f32 %v314, %v381
    %v383 = vpop.f32.mrb[0].mxu0
    %384 = vmatprep.mubr.f32.mxu0 0.0
    %385 = vmatmul.mubr.f32.gmra.mrb[0].mxu0 %v57
    %v386 = vpop.f32.mrb[0].mxu0
    %v387 = vadd.f32 %v314, %v386
    %v388 = vpop.f32.mrb[0].mxu0
    %389 = vmatprep.mubr.f32.mxu0 0.0
    %390 = vmatmul.mubr.f32.gmra.mrb[0].mxu0 %v60
    %v391 = vpop.f32.mrb[0].mxu0
    %v392 = vadd.f32 %v314, %v391
    %v393 = vpop.f32.mrb[0].mxu0
    %394 = vmatprep.mubr.f32.mxu0 0.0
    %395 = vmatmul.mubr.f32.gmra.mrb[0].mxu0 %v63
    %v396 = vpop.f32.mrb[0].mxu0
    %v397 = vadd.f32 %v314, %v396
    %v398 = vpop.f32.mrb[0].mxu0
    %399 = vmatprep.mubr.f32.mxu0 0.0
    %400 = vmatmul.mubr.f32.gmra.mrb[0].mxu0 %v66
    %v401 = vpop.f32.mrb[0].mxu0
    %v402 = vadd.f32 %v314, %v401
    %v403 = vpop.f32.mrb[0].mxu0
    %404 = vmatprep.mubr.f32.mxu0 0.0
    %405 = vmatmul.mubr.f32.gmra.mrb[0].mxu0 %v69
    %v406 = vpop.f32.mrb[0].mxu0
    %v407 = vadd.f32 %v314, %v406
    %v408 = vpop.f32.mrb[0].mxu0
    %409 = vmatprep.mubr.f32.mxu0 0.0
    %410 = vmatmul.mubr.f32.gmra.mrb[0].mxu0 %v72
    %v411 = vpop.f32.mrb[0].mxu0
    %v412 = vadd.f32 %v314, %v411
    %v413 = vpop.f32.mrb[0].mxu0
    %414 = vmatprep.mubr.f32.mxu0 0.0
    %415 = vmatmul.mubr.f32.gmra.mrb[0].mxu0 %v75
    %v416 = vpop.f32.mrb[0].mxu0
    %v417 = vadd.f32 %v314, %v416
    %v418 = vpop.f32.mrb[0].mxu0
    %419 = vdwg.mxu0
    %v420 = vtanh.pop %v382
    %v421 = vtanh.pop %v387
    %v422 = vtanh.pop %v392
    %v423 = vtanh.pop %v397
    %v424 = vtanh.pop %v402
    %v425 = vtanh.pop %v407
    %v426 = vtanh.pop %v412
    %v427 = vtanh.pop %v417
    %s428 = scalar_lea.vmem [#allocation2], 128
    %v429 = vld [vmem:[%s428] sm:$0xff]
    %v430 = vld [vmem:[%s428 + $0x8] sm:$0xff]
    %v431 = vld [vmem:[%s428 + $0x10] sm:$0xff]
    %v432 = vld [vmem:[%s428 + $0x18] sm:$0xff]
    %v433 = vld [vmem:[%s428 + $0x20] sm:$0xff]
    %v434 = vld [vmem:[%s428 + $0x28] sm:$0xff]
    %v435 = vld [vmem:[%s428 + $0x30] sm:$0xff]
    %v436 = vld [vmem:[%s428 + $0x38] sm:$0xff]
    %v437 = vld [vmem:[%s428 + $0x40] sm:$0xff]
    %v438 = vld [vmem:[%s428 + $0x48] sm:$0xff]
    %v439 = vld [vmem:[%s428 + $0x50] sm:$0xff]
    %v440 = vld [vmem:[%s428 + $0x58] sm:$0xff]
    %v441 = vld [vmem:[%s428 + $0x60] sm:$0xff]
    %v442 = vld [vmem:[%s428 + $0x68] sm:$0xff]
    %v443 = vld [vmem:[%s428 + $0x70] sm:$0xff]
    %v444 = vld [vmem:[%s428 + $0x78] sm:$0xff]
    %445 = vmatprep.subr.mxu0 0.0
    %446 = vmatpush1.msra.mxu0 %v429
    %447 = vmatprep.subr.mxu0 0.0
    %448 = vmatpush1.msra.mxu0 %v430
    %449 = vmatprep.subr.mxu0 0.0
    %450 = vmatpush1.msra.mxu0 %v431
    %451 = vmatprep.subr.mxu0 0.0
    %452 = vmatpush1.msra.mxu0 %v432
    %453 = vmatprep.subr.mxu0 0.0
    %454 = vmatpush1.msra.mxu0 %v433
    %455 = vmatprep.subr.mxu0 0.0
    %456 = vmatpush1.msra.mxu0 %v434
    %457 = vmatprep.subr.mxu0 0.0
    %458 = vmatpush1.msra.mxu0 %v435
    %459 = vmatprep.subr.mxu0 0.0
    %460 = vmatpush1.msra.mxu0 %v436
    %461 = vmatprep.subr.mxu0 0.0
    %462 = vmatpush1.msra.mxu0 %v437
    %463 = vmatprep.subr.mxu0 0.0
    %464 = vmatpush1.msra.mxu0 %v438
    %465 = vmatprep.subr.mxu0 0.0
    %466 = vmatpush1.msra.mxu0 %v439
    %467 = vmatprep.subr.mxu0 0.0
    %468 = vmatpush1.msra.mxu0 %v440
    %469 = vmatprep.subr.mxu0 0.0
    %470 = vmatpush1.msra.mxu0 %v441
    %471 = vmatprep.subr.mxu0 0.0
    %472 = vmatpush1.msra.mxu0 %v442
    %473 = vmatprep.subr.mxu0 0.0
    %474 = vmatpush1.msra.mxu0 %v443
    %475 = vmatprep.subr.mxu0 0.0
    %476 = vmatpush1.msra.mxu0 %v444
    %477 = vmatprep.subr.mxu0 0.0
    %478 = vmatpush1.msra.mxu0 0.0
    %479 = vmatprep.subr.mxu0 0.0
    %480 = vmatpush1.msra.mxu0 0.0
    %481 = vmatprep.subr.mxu0 0.0
    %482 = vmatpush1.msra.mxu0 0.0
    %483 = vmatprep.subr.mxu0 0.0
    %484 = vmatpush1.msra.mxu0 0.0
    %485 = vmatprep.subr.mxu0 0.0
    %486 = vmatpush1.msra.mxu0 0.0
    %487 = vmatprep.subr.mxu0 0.0
    %488 = vmatpush1.msra.mxu0 0.0
    %489 = vmatprep.subr.mxu0 0.0
    %490 = vmatpush1.msra.mxu0 0.0
    %491 = vmatprep.subr.mxu0 0.0
    %492 = vmatpush1.msra.mxu0 0.0
    %493 = vmatprep.subr.mxu0 0.0
    %494 = vmatpush1.msra.mxu0 0.0
    %495 = vmatprep.subr.mxu0 0.0
    %496 = vmatpush1.msra.mxu0 0.0
    %497 = vmatprep.subr.mxu0 0.0
    %498 = vmatpush1.msra.mxu0 0.0
    %499 = vmatprep.subr.mxu0 0.0
    %500 = vmatpush1.msra.mxu0 0.0
    %501 = vmatprep.subr.mxu0 0.0
    %502 = vmatpush1.msra.mxu0 0.0
    %503 = vmatprep.subr.mxu0 0.0
    %504 = vmatpush1.msra.mxu0 0.0
    %505 = vmatprep.subr.mxu0 0.0
    %506 = vmatpush1.msra.mxu0 0.0
    %507 = vmatprep.subr.mxu0 0.0
    %508 = vmatpush1.msra.mxu0 0.0
    %509 = vmatprep.mubr.f32.mxu0 0.0
    %510 = vmatmul.mubr.f32.gmra.mrb[0].mxu0 %v420
    %v511 = vpop.f32.mrb[0].mxu0
    %v512 = vadd.f32 0.0, %v511
    %v513 = vpop.f32.mrb[0].mxu0
    %514 = vmatprep.mubr.f32.mxu0 0.0
    %515 = vmatmul.mubr.f32.gmra.mrb[0].mxu0 %v421
    %v516 = vpop.f32.mrb[0].mxu0
    %v517 = vadd.f32 0.0, %v516
    %v518 = vpop.f32.mrb[0].mxu0
    %519 = vmatprep.mubr.f32.mxu0 0.0
    %520 = vmatmul.mubr.f32.gmra.mrb[0].mxu0 %v422
    %v521 = vpop.f32.mrb[0].mxu0
    %v522 = vadd.f32 0.0, %v521
    %v523 = vpop.f32.mrb[0].mxu0
    %524 = vmatprep.mubr.f32.mxu0 0.0
    %525 = vmatmul.mubr.f32.gmra.mrb[0].mxu0 %v423
    %v526 = vpop.f32.mrb[0].mxu0
    %v527 = vadd.f32 0.0, %v526
    %v528 = vpop.f32.mrb[0].mxu0
    %529 = vmatprep.mubr.f32.mxu0 0.0
    %530 = vmatmul.mubr.f32.gmra.mrb[0].mxu0 %v424
    %v531 = vpop.f32.mrb[0].mxu0
    %v532 = vadd.f32 0.0, %v531
    %v533 = vpop.f32.mrb[0].mxu0
    %534 = vmatprep.mubr.f32.mxu0 0.0
    %535 = vmatmul.mubr.f32.gmra.mrb[0].mxu0 %v425
    %v536 = vpop.f32.mrb[0].mxu0
    %v537 = vadd.f32 0.0, %v536
    %v538 = vpop.f32.mrb[0].mxu0
    %539 = vmatprep.mubr.f32.mxu0 0.0
    %540 = vmatmul.mubr.f32.gmra.mrb[0].mxu0 %v426
    %v541 = vpop.f32.mrb[0].mxu0
    %v542 = vadd.f32 0.0, %v541
    %v543 = vpop.f32.mrb[0].mxu0
    %544 = vmatprep.mubr.f32.mxu0 0.0
    %545 = vmatmul.mubr.f32.gmra.mrb[0].mxu0 %v427
    %v546 = vpop.f32.mrb[0].mxu0
    %v547 = vadd.f32 0.0, %v546
    %v548 = vpop.f32.mrb[0].mxu0
    %549 = vdwg.mxu0
    %v550 = vlaneseq
    %v551 = vshrl.u32 %v550, 7
    %v552 = vsub.s32 2, %v551
    %v553 = vrot.slane %v39, %v552
    %554 = vmatprep.subr.mxu0 0.0
    %555 = vmatpush1.msra.mxu0 %v512
    %556 = vmatprep.subr.mxu0 0.0
    %557 = vmatpush1.msra.mxu0 %v517
    %558 = vmatprep.subr.mxu0 0.0
    %559 = vmatpush1.msra.mxu0 %v522
    %560 = vmatprep.subr.mxu0 0.0
    %561 = vmatpush1.msra.mxu0 %v527
    %562 = vmatprep.subr.mxu0 0.0
    %563 = vmatpush1.msra.mxu0 %v532
    %564 = vmatprep.subr.mxu0 0.0
    %565 = vmatpush1.msra.mxu0 %v537
    %566 = vmatprep.subr.mxu0 0.0
    %567 = vmatpush1.msra.mxu0 %v542
    %568 = vmatprep.subr.mxu0 0.0
    %569 = vmatpush1.msra.mxu0 %v547
    %570 = vmatprep.subr.mxu0 0.0
    %571 = vmatpush1.msra.mxu0 0.0
    %572 = vmatprep.subr.mxu0 0.0
    %573 = vmatpush1.msra.mxu0 0.0
    %574 = vmatprep.subr.mxu0 0.0
    %575 = vmatpush1.msra.mxu0 0.0
    %576 = vmatprep.subr.mxu0 0.0
    %577 = vmatpush1.msra.mxu0 0.0
    %578 = vmatprep.subr.mxu0 0.0
    %579 = vmatpush1.msra.mxu0 0.0
    %580 = vmatprep.subr.mxu0 0.0
    %581 = vmatpush1.msra.mxu0 0.0
    %582 = vmatprep.subr.mxu0 0.0
    %583 = vmatpush1.msra.mxu0 0.0
    %584 = vmatprep.subr.mxu0 0.0
    %585 = vmatpush1.msra.mxu0 0.0
    %586 = vmatprep.subr.mxu0 0.0
    %587 = vmatpush1.msra.mxu0 0.0
    %588 = vmatprep.subr.mxu0 0.0
    %589 = vmatpush1.msra.mxu0 0.0
    %590 = vmatprep.subr.mxu0 0.0
    %591 = vmatpush1.msra.mxu0 0.0
    %592 = vmatprep.subr.mxu0 0.0
    %593 = vmatpush1.msra.mxu0 0.0
    %594 = vmatprep.subr.mxu0 0.0
    %595 = vmatpush1.msra.mxu0 0.0
    %596 = vmatprep.subr.mxu0 0.0
    %597 = vmatpush1.msra.mxu0 0.0
    %598 = vmatprep.subr.mxu0 0.0
    %599 = vmatpush1.msra.mxu0 0.0
    %600 = vmatprep.subr.mxu0 0.0
    %601 = vmatpush1.msra.mxu0 0.0
    %602 = vmatprep.subr.mxu0 0.0
    %603 = vmatpush1.msra.mxu0 0.0
    %604 = vmatprep.subr.mxu0 0.0
    %605 = vmatpush1.msra.mxu0 0.0
    %606 = vmatprep.subr.mxu0 0.0
    %607 = vmatpush1.msra.mxu0 0.0
    %608 = vmatprep.subr.mxu0 0.0
    %609 = vmatpush1.msra.mxu0 0.0
    %610 = vmatprep.subr.mxu0 0.0
    %611 = vmatpush1.msra.mxu0 0.0
    %612 = vmatprep.subr.mxu0 0.0
    %613 = vmatpush1.msra.mxu0 0.0
    %614 = vmatprep.subr.mxu0 0.0
    %615 = vmatpush1.msra.mxu0 0.0
    %616 = vmatprep.subr.mxu0 0.0
    %617 = vmatpush1.msra.mxu0 0.0
    %618 = vmatprep.mubr.f32.mxu0 0.0
    %619 = vmatmul.mubr.f32.gmra.mrb[0].mxu0 %v54
    %v620 = vpop.f32.mrb[0].mxu0
    %v621 = vadd.f32 %v553, %v620
    %v622 = vpop.f32.mrb[0].mxu0
    %623 = vmatprep.mubr.f32.mxu0 0.0
    %624 = vmatmul.mubr.f32.gmra.mrb[0].mxu0 %v57
    %v625 = vpop.f32.mrb[0].mxu0
    %v626 = vadd.f32 %v553, %v625
    %v627 = vpop.f32.mrb[0].mxu0
    %628 = vmatprep.mubr.f32.mxu0 0.0
    %629 = vmatmul.mubr.f32.gmra.mrb[0].mxu0 %v60
    %v630 = vpop.f32.mrb[0].mxu0
    %v631 = vadd.f32 %v553, %v630
    %v632 = vpop.f32.mrb[0].mxu0
    %633 = vmatprep.mubr.f32.mxu0 0.0
    %634 = vmatmul.mubr.f32.gmra.mrb[0].mxu0 %v63
    %v635 = vpop.f32.mrb[0].mxu0
    %v636 = vadd.f32 %v553, %v635
    %v637 = vpop.f32.mrb[0].mxu0
    %638 = vmatprep.mubr.f32.mxu0 0.0
    %639 = vmatmul.mubr.f32.gmra.mrb[0].mxu0 %v66
    %v640 = vpop.f32.mrb[0].mxu0
    %v641 = vadd.f32 %v553, %v640
    %v642 = vpop.f32.mrb[0].mxu0
    %643 = vmatprep.mubr.f32.mxu0 0.0
    %644 = vmatmul.mubr.f32.gmra.mrb[0].mxu0 %v69
    %v645 = vpop.f32.mrb[0].mxu0
    %v646 = vadd.f32 %v553, %v645
    %v647 = vpop.f32.mrb[0].mxu0
    %648 = vmatprep.mubr.f32.mxu0 0.0
    %649 = vmatmul.mubr.f32.gmra.mrb[0].mxu0 %v72
    %v650 = vpop.f32.mrb[0].mxu0
    %v651 = vadd.f32 %v553, %v650
    %v652 = vpop.f32.mrb[0].mxu0
    %653 = vmatprep.mubr.f32.mxu0 0.0
    %654 = vmatmul.mubr.f32.gmra.mrb[0].mxu0 %v75
    %v655 = vpop.f32.mrb[0].mxu0
    %v656 = vadd.f32 %v553, %v655
    %v657 = vpop.f32.mrb[0].mxu0
    %658 = vdwg.mxu0
    %v659 = vtanh.pop %v621
    %v660 = vtanh.pop %v626
    %v661 = vtanh.pop %v631
    %v662 = vtanh.pop %v636
    %v663 = vtanh.pop %v641
    %v664 = vtanh.pop %v646
    %v665 = vtanh.pop %v651
    %v666 = vtanh.pop %v656
    %s667 = scalar_lea.vmem [#allocation2], 256
    %v668 = vld [vmem:[%s667] sm:$0xff]
    %v669 = vld [vmem:[%s667 + $0x8] sm:$0xff]
    %v670 = vld [vmem:[%s667 + $0x10] sm:$0xff]
    %v671 = vld [vmem:[%s667 + $0x18] sm:$0xff]
    %v672 = vld [vmem:[%s667 + $0x20] sm:$0xff]
    %v673 = vld [vmem:[%s667 + $0x28] sm:$0xff]
    %v674 = vld [vmem:[%s667 + $0x30] sm:$0xff]
    %v675 = vld [vmem:[%s667 + $0x38] sm:$0xff]
    %v676 = vld [vmem:[%s667 + $0x40] sm:$0xff]
    %v677 = vld [vmem:[%s667 + $0x48] sm:$0xff]
    %v678 = vld [vmem:[%s667 + $0x50] sm:$0xff]
    %v679 = vld [vmem:[%s667 + $0x58] sm:$0xff]
    %v680 = vld [vmem:[%s667 + $0x60] sm:$0xff]
    %v681 = vld [vmem:[%s667 + $0x68] sm:$0xff]
    %v682 = vld [vmem:[%s667 + $0x70] sm:$0xff]
    %v683 = vld [vmem:[%s667 + $0x78] sm:$0xff]
    %v684 = vlaneseq
    %v685 = vshrl.u32 %v684, 7
    %v686 = vsub.s32 3, %v685
    %v687 = vrot.slane %v39, %v686
    %688 = vmatprep.subr.mxu0 0.0
    %689 = vmatpush1.msra.mxu0 %v668
    %690 = vmatprep.subr.mxu0 0.0
    %691 = vmatpush1.msra.mxu0 %v669
    %692 = vmatprep.subr.mxu0 0.0
    %693 = vmatpush1.msra.mxu0 %v670
    %694 = vmatprep.subr.mxu0 0.0
    %695 = vmatpush1.msra.mxu0 %v671
    %696 = vmatprep.subr.mxu0 0.0
    %697 = vmatpush1.msra.mxu0 %v672
    %698 = vmatprep.subr.mxu0 0.0
    %699 = vmatpush1.msra.mxu0 %v673
    %700 = vmatprep.subr.mxu0 0.0
    %701 = vmatpush1.msra.mxu0 %v674
    %702 = vmatprep.subr.mxu0 0.0
    %703 = vmatpush1.msra.mxu0 %v675
    %704 = vmatprep.subr.mxu0 0.0
    %705 = vmatpush1.msra.mxu0 %v676
    %706 = vmatprep.subr.mxu0 0.0
    %707 = vmatpush1.msra.mxu0 %v677
    %708 = vmatprep.subr.mxu0 0.0
    %709 = vmatpush1.msra.mxu0 %v678
    %710 = vmatprep.subr.mxu0 0.0
    %711 = vmatpush1.msra.mxu0 %v679
    %712 = vmatprep.subr.mxu0 0.0
    %713 = vmatpush1.msra.mxu0 %v680
    %714 = vmatprep.subr.mxu0 0.0
    %715 = vmatpush1.msra.mxu0 %v681
    %716 = vmatprep.subr.mxu0 0.0
    %717 = vmatpush1.msra.mxu0 %v682
    %718 = vmatprep.subr.mxu0 0.0
    %719 = vmatpush1.msra.mxu0 %v683
    %720 = vmatprep.subr.mxu0 0.0
    %721 = vmatpush1.msra.mxu0 0.0
    %722 = vmatprep.subr.mxu0 0.0
    %723 = vmatpush1.msra.mxu0 0.0
    %724 = vmatprep.subr.mxu0 0.0
    %725 = vmatpush1.msra.mxu0 0.0
    %726 = vmatprep.subr.mxu0 0.0
    %727 = vmatpush1.msra.mxu0 0.0
    %728 = vmatprep.subr.mxu0 0.0
    %729 = vmatpush1.msra.mxu0 0.0
    %730 = vmatprep.subr.mxu0 0.0
    %731 = vmatpush1.msra.mxu0 0.0
    %732 = vmatprep.subr.mxu0 0.0
    %733 = vmatpush1.msra.mxu0 0.0
    %734 = vmatprep.subr.mxu0 0.0
    %735 = vmatpush1.msra.mxu0 0.0
    %736 = vmatprep.subr.mxu0 0.0
    %737 = vmatpush1.msra.mxu0 0.0
    %738 = vmatprep.subr.mxu0 0.0
    %739 = vmatpush1.msra.mxu0 0.0
    %740 = vmatprep.subr.mxu0 0.0
    %741 = vmatpush1.msra.mxu0 0.0
    %742 = vmatprep.subr.mxu0 0.0
    %743 = vmatpush1.msra.mxu0 0.0
    %744 = vmatprep.subr.mxu0 0.0
    %745 = vmatpush1.msra.mxu0 0.0
    %746 = vmatprep.subr.mxu0 0.0
    %747 = vmatpush1.msra.mxu0 0.0
    %748 = vmatprep.subr.mxu0 0.0
    %749 = vmatpush1.msra.mxu0 0.0
    %750 = vmatprep.subr.mxu0 0.0
    %751 = vmatpush1.msra.mxu0 0.0
    %752 = vmatprep.mubr.f32.mxu0 0.0
    %753 = vmatmul.mubr.f32.gmra.mrb[0].mxu0 %v659
    %v754 = vpop.f32.mrb[0].mxu0
    %v755 = vadd.f32 %v687, %v754
    %v756 = vpop.f32.mrb[0].mxu0
    %757 = vmatprep.mubr.f32.mxu0 0.0
    %758 = vmatmul.mubr.f32.gmra.mrb[0].mxu0 %v660
    %v759 = vpop.f32.mrb[0].mxu0
    %v760 = vadd.f32 %v687, %v759
    %v761 = vpop.f32.mrb[0].mxu0
    %762 = vmatprep.mubr.f32.mxu0 0.0
    %763 = vmatmul.mubr.f32.gmra.mrb[0].mxu0 %v661
    %v764 = vpop.f32.mrb[0].mxu0
    %v765 = vadd.f32 %v687, %v764
    %v766 = vpop.f32.mrb[0].mxu0
    %767 = vmatprep.mubr.f32.mxu0 0.0
    %768 = vmatmul.mubr.f32.gmra.mrb[0].mxu0 %v662
    %v769 = vpop.f32.mrb[0].mxu0
    %v770 = vadd.f32 %v687, %v769
    %v771 = vpop.f32.mrb[0].mxu0
    %772 = vmatprep.mubr.f32.mxu0 0.0
    %773 = vmatmul.mubr.f32.gmra.mrb[0].mxu0 %v663
    %v774 = vpop.f32.mrb[0].mxu0
    %v775 = vadd.f32 %v687, %v774
    %v776 = vpop.f32.mrb[0].mxu0
    %777 = vmatprep.mubr.f32.mxu0 0.0
    %778 = vmatmul.mubr.f32.gmra.mrb[0].mxu0 %v664
    %v779 = vpop.f32.mrb[0].mxu0
    %v780 = vadd.f32 %v687, %v779
    %v781 = vpop.f32.mrb[0].mxu0
    %782 = vmatprep.mubr.f32.mxu0 0.0
    %783 = vmatmul.mubr.f32.gmra.mrb[0].mxu0 %v665
    %v784 = vpop.f32.mrb[0].mxu0
    %v785 = vadd.f32 %v687, %v784
    %v786 = vpop.f32.mrb[0].mxu0
    %787 = vmatprep.mubr.f32.mxu0 0.0
    %788 = vmatmul.mubr.f32.gmra.mrb[0].mxu0 %v666
    %v789 = vpop.f32.mrb[0].mxu0
    %v790 = vadd.f32 %v687, %v789
    %v791 = vpop.f32.mrb[0].mxu0
    %792 = vdwg.mxu0
    %v793 = vadd.f32 %v659, %v755
    %v794 = vadd.f32 %v660, %v760
    %v795 = vadd.f32 %v661, %v765
    %v796 = vadd.f32 %v662, %v770
    %v797 = vadd.f32 %v663, %v775
    %v798 = vadd.f32 %v664, %v780
    %v799 = vadd.f32 %v665, %v785
    %v800 = vadd.f32 %v666, %v790
    %801 = vst [vmem:[%s4] sm:$0xff] %v793
    %802 = vst [vmem:[%s4 + $0x8] sm:$0xff] %v794
    %803 = vst [vmem:[%s4 + $0x10] sm:$0xff] %v795
    %804 = vst [vmem:[%s4 + $0x18] sm:$0xff] %v796
    %805 = vst [vmem:[%s4 + $0x20] sm:$0xff] %v797
    %806 = vst [vmem:[%s4 + $0x28] sm:$0xff] %v798
    %807 = vst [vmem:[%s4 + $0x30] sm:$0xff] %v799
    %808 = vst [vmem:[%s4 + $0x38] sm:$0xff] %v800
    // Predicated region
    $region22: #{gcn_forward.1} parent=1 // pred_check
      _
    $region23: #{gcn_forward.1} parent=1 // pred_check_branch
      %810 = sbr.rel (0) target = $region25
    $region24: #{gcn_forward.1} parent=1 // pred_region
      _
    $region25: #{gcn_forward.1} parent=1 // pred_fallthru
      _
    // Predicated region
    $region26: #{gcn_forward.1} parent=1 // pred_check
      _
    $region27: #{gcn_forward.1} parent=1 // pred_check_branch
      %812 = sbr.rel (0) target = $region29
    $region28: #{gcn_forward.1} parent=1 // pred_region
      _
    $region29: #{gcn_forward.1} parent=1 // pred_fallthru
      _
    %813 = vsyncpa [#allocation3], 1

</llo_original>
